<compile_context>
chip_gen: v7x
topology: tpu7x:2x2x1
jax: 0.10.0
libtpu: 0.0.40
codegen_flags: <defaults>
</compile_context>

<pallas_src>
import jax
import jax.numpy as jnp
from jax.experimental import pallas as pl
from jax.experimental.pallas import tpu as pltpu


def _round_up(x, m):
    return (x + m - 1) // m * m


def _cdiv(a, b):
    return -(-a // b)


# -----------------------------------------------------------------------------
# Kernel: fused  matmul1(bf16) -> bias+ReLU -> matmul2(bf16) -> bias -> softmax
# -----------------------------------------------------------------------------
def actor_kernel(obs_ref, w1_ref, b1_ref, w2_ref, b2_ref, out_ref):
    # Layer 1: bf16 MXU matmul, f32 accumulation, f32 bias + ReLU.
    x = obs_ref[...].astype(jnp.bfloat16)
    h = jnp.dot(x, w1_ref[...], preferred_element_type=jnp.float32)
    h = jnp.maximum(h + b1_ref[...], 0.0)

    # Layer 2: bf16 MXU matmul over the padded, lane-dense action dim; the
    # accumulator and the bias add stay f32 (the -1e30 padding trick and the
    # softmax max/sum rely on f32 logits).
    logits = jnp.dot(h.astype(jnp.bfloat16), w2_ref[...],
                     preferred_element_type=jnp.float32)
    logits = logits + b2_ref[...]  # padded lanes carry a -1e30 bias

    # Numerically-stable softmax over the lane (action) axis.  Padded lanes
    # underflow to exp(...) == 0 so they contribute nothing to the sum.
    m = jnp.max(logits, axis=-1, keepdims=True)
    e = jnp.exp(logits - m)
    denom = jnp.sum(e, axis=-1, keepdims=True)
    inv = pl.reciprocal(denom, approx=True)        # EUP slot, VALU stays free
    out_ref[...] = (e * inv).astype(out_ref.dtype)


# -----------------------------------------------------------------------------
# One-time parameter preparation (hoisted out of the forward path).
# -----------------------------------------------------------------------------
def prepare_actor_params(w1, b1, w2, b2):
    """w1: (obs_dim, H); b1: (H,); w2: (H, A); b2: (A,).  Returns padded/cast
    tensors ready for the kernel plus the true action_dim A."""
    H = w1.shape[1]
    A = w2.shape[1]
    Ap = max(128, _round_up(A, 128))               # lane-dense action padding

    w1b = w1.astype(jnp.bfloat16)                                   # (D, H)  bf16
    b1r = b1.reshape(1, H).astype(jnp.float32)                      # (1, H)  f32
    w2p = (jnp.zeros((H, Ap), jnp.bfloat16)
           .at[:, :A].set(w2.astype(jnp.bfloat16)))                 # (H, Ap) bf16
    b2p = (jnp.full((1, Ap), -1e30, jnp.float32)
           .at[:, :A].set(b2.reshape(1, A).astype(jnp.float32)))    # (1, Ap) f32
    return (w1b, b1r, w2p, b2p, A)


def _choose_tile_b(B, cap, sub):
    """Pick a batch tile that minimizes padding waste; keep >= 2 grid steps
    for large batches so v7x can shard the 'parallel' axis over both TCs."""
    n = max(1, _cdiv(B, cap))                 # minimum number of grid steps
    tile = max(sub, _round_up(_cdiv(B, n), sub))
    if B >= 512 and _cdiv(B, tile) < 2:       # guarantee megacore utilization
        tile = max(sub, _round_up(_cdiv(B, 2), sub))
    return tile


# -----------------------------------------------------------------------------
# Forward pass.
# -----------------------------------------------------------------------------
def actor_discrete_forward(obs, prepared, *, out_dtype=jnp.bfloat16,
                           tile_b_cap=512, return_padded=False):
    """obs: (B, obs_dim) f32.  `prepared` comes from prepare_actor_params."""
    w1b, b1r, w2p, b2p, A = prepared
    B, D = obs.shape
    H = w1b.shape[1]
    Ap = w2p.shape[1]

    # Batch tiling (sublane-aligned for the output dtype: 16 rows for bf16).
    sub = 16 if out_dtype == jnp.bfloat16 else 8
    tile_b = _choose_tile_b(B, tile_b_cap, sub)
    Bp = _round_up(B, tile_b)
    obs_p = obs.astype(jnp.float32)
    if Bp != B:
        obs_p = jnp.pad(obs_p, ((0, Bp - B), (0, 0)))
    grid = (Bp // tile_b,)

    out_bytes = 2 if out_dtype == jnp.bfloat16 else 4
    cost = pl.CostEstimate(
        flops=int(2 * Bp * D * H + 2 * Bp * H * Ap),
        transcendentals=int(Bp * Ap + Bp),
        bytes_accessed=int(Bp * D * 4 + D * H * 2 + H * 4
                           + H * Ap * 2 + Ap * 4 + Bp * Ap * out_bytes),
    )

    out = pl.pallas_call(
        actor_kernel,
        out_shape=jax.ShapeDtypeStruct((Bp, Ap), out_dtype),
        grid_spec=pltpu.PrefetchScalarGridSpec(
            num_scalar_prefetch=0,
            grid=grid,
            in_specs=[
                pl.BlockSpec((tile_b, D), lambda i: (i, 0)),   # obs tile
                pl.BlockSpec((D, H), lambda i: (0, 0)),        # W1 (resident, bf16)
                pl.BlockSpec((1, H), lambda i: (0, 0)),        # b1 (f32)
                pl.BlockSpec((H, Ap), lambda i: (0, 0)),       # W2 (padded, bf16)
                pl.BlockSpec((1, Ap), lambda i: (0, 0)),       # b2 (padded, -1e30, f32)
            ],
            out_specs=pl.BlockSpec((tile_b, Ap), lambda i: (i, 0)),
        ),
        compiler_params=pltpu.CompilerParams(
            dimension_semantics=("parallel",),
        ),
        cost_estimate=cost,
    )(obs_p, w1b, b1r, w2p, b2p)

    if return_padded:
        return out            # (Bp, Ap) bf16; padded lanes/rows are exact zeros
    return out[:B, :A]


def init_params(key, obs_dim, hidden, action_dim):
    # Mimic PyTorch default Linear init: uniform(-1/sqrt(fan_in), 1/sqrt(fan_in)).
    k1, k2, k3, k4 = jax.random.split(key, 4)
    bound1 = 1.0 / jnp.sqrt(obs_dim)
    bound2 = 1.0 / jnp.sqrt(hidden)
    w1 = jax.random.uniform(k1, (obs_dim, hidden), jnp.float32, -bound1, bound1)
    b1 = jax.random.uniform(k2, (hidden,), jnp.float32, -bound1, bound1)
    w2 = jax.random.uniform(k3, (hidden, action_dim), jnp.float32, -bound2, bound2)
    b2 = jax.random.uniform(k4, (action_dim,), jnp.float32, -bound2, bound2)
    return w1, b1, w2, b2


if __name__ == "__main__":
    key = jax.random.PRNGKey(0)
    k_obs, k_params = jax.random.split(key)

    # Small shapes consistent with the module (Pong-like: 6 discrete actions).
    batch, obs_dim, hidden, action_dim = 16, 32, 128, 6

    obs = jax.random.normal(k_obs, (batch, obs_dim), jnp.float32)
    w1, b1, w2, b2 = init_params(k_params, obs_dim, hidden, action_dim)

    prepared = prepare_actor_params(w1, b1, w2, b2)   # one-time setup
    probs = actor_discrete_forward(obs, prepared)
    probs = jax.block_until_ready(probs)

    # Pure-JAX f32 reference.  The kernel runs both matmuls in bf16 (f32 acc)
    # and emits bf16 probabilities, so tolerances are relaxed accordingly.
    h_ref = jnp.maximum(obs @ w1 + b1[None, :], 0.0)
    logits_ref = h_ref @ w2 + b2[None, :]
    ref = jax.nn.softmax(logits_ref, axis=1)

    probs_f32 = probs.astype(jnp.float32)
    assert probs.shape == (batch, action_dim)
    assert probs.dtype == jnp.bfloat16
    assert jnp.allclose(jnp.sum(probs_f32, axis=1), 1.0, atol=3e-2)
    assert jnp.allclose(probs_f32, ref, atol=3e-2, rtol=3e-2)

    print("KERNEL_OK")
</pallas_src>

<mosaic_0001>
module attributes {stable_mosaic.version = 11 : i64} {
  func.func @actor_kernel(%arg0: i32, %arg1: memref<16x32xf32, #tpu.memory_space<vmem>>, %arg2: memref<32x128xbf16, #tpu.memory_space<vmem>>, %arg3: memref<1x128xf32, #tpu.memory_space<vmem>>, %arg4: memref<128x128xbf16, #tpu.memory_space<vmem>>, %arg5: memref<1x128xf32, #tpu.memory_space<vmem>>, %arg6: memref<16x128xbf16, #tpu.memory_space<vmem>>) attributes {dimension_semantics = [#tpu.dimension_semantics<parallel>], iteration_bounds = array<i64: 1>, scalar_prefetch = 0 : i64, scratch_operands = 0 : i64, tpu.core_type = #tpu.core_type<tc>, window_params = [{transform_indices = @transform_0, window_bounds = array<i64: 16, 32>}, {pipeline_mode = #tpu.pipeline_mode<synchronous>, transform_indices = @transform_1, window_bounds = array<i64: 32, 128>}, {pipeline_mode = #tpu.pipeline_mode<synchronous>, transform_indices = @transform_2, window_bounds = array<i64: 1, 128>}, {pipeline_mode = #tpu.pipeline_mode<synchronous>, transform_indices = @transform_3, window_bounds = array<i64: 128, 128>}, {pipeline_mode = #tpu.pipeline_mode<synchronous>, transform_indices = @transform_4, window_bounds = array<i64: 1, 128>}, {transform_indices = @transform_5, window_bounds = array<i64: 16, 128>}]} {
    %c0 = arith.constant 0 : index
    %c0_0 = arith.constant 0 : index
    %0 = vector.load %arg1[%c0, %c0_0] : memref<16x32xf32, #tpu.memory_space<vmem>>, vector<16x32xf32>
    %1 = arith.truncf %0 : vector<16x32xf32> to vector<16x32xbf16>
    %c0_1 = arith.constant 0 : index
    %c0_2 = arith.constant 0 : index
    %2 = vector.load %arg2[%c0_1, %c0_2] : memref<32x128xbf16, #tpu.memory_space<vmem>>, vector<32x128xbf16>
    %cst = arith.constant dense<0.000000e+00> : vector<16x128xf32>
    %3 = tpu.matmul %1, %2, %cst {dimension_numbers = #tpu.dot_dimension_numbers<[1], [0], [0], [1], [0, 0, 1, 1], [], []>} : vector<16x32xbf16>, vector<32x128xbf16>, vector<16x128xf32> -> vector<16x128xf32>
    %c0_3 = arith.constant 0 : index
    %c0_4 = arith.constant 0 : index
    %4 = vector.load %arg3[%c0_3, %c0_4] : memref<1x128xf32, #tpu.memory_space<vmem>>, vector<1x128xf32>
    %5 = vector.broadcast %4 : vector<1x128xf32> to vector<16x128xf32>
    %6 = arith.addf %3, %5 : vector<16x128xf32>
    %cst_5 = arith.constant 0.000000e+00 : f32
    %7 = vector.broadcast %cst_5 : f32 to vector<16x128xf32>
    %8 = arith.maximumf %6, %7 : vector<16x128xf32>
    %9 = arith.truncf %8 : vector<16x128xf32> to vector<16x128xbf16>
    %c0_6 = arith.constant 0 : index
    %c0_7 = arith.constant 0 : index
    %10 = vector.load %arg4[%c0_6, %c0_7] : memref<128x128xbf16, #tpu.memory_space<vmem>>, vector<128x128xbf16>
    %cst_8 = arith.constant dense<0.000000e+00> : vector<16x128xf32>
    %11 = tpu.matmul %9, %10, %cst_8 {dimension_numbers = #tpu.dot_dimension_numbers<[1], [0], [0], [1], [0, 0, 1, 1], [], []>} : vector<16x128xbf16>, vector<128x128xbf16>, vector<16x128xf32> -> vector<16x128xf32>
    %c0_9 = arith.constant 0 : index
    %c0_10 = arith.constant 0 : index
    %12 = vector.load %arg5[%c0_9, %c0_10] : memref<1x128xf32, #tpu.memory_space<vmem>>, vector<1x128xf32>
    %13 = vector.broadcast %12 : vector<1x128xf32> to vector<16x128xf32>
    %14 = arith.addf %11, %13 : vector<16x128xf32>
    %cst_11 = arith.constant dense<0xFF800000> : vector<16xf32>
    %15 = vector.multi_reduction <maximumf>, %14, %cst_11 [1] : vector<16x128xf32> to vector<16xf32>
    %16 = vector.shape_cast %15 : vector<16xf32> to vector<16x1xf32>
    %17 = vector.broadcast %16 : vector<16x1xf32> to vector<16x128xf32>
    %18 = arith.subf %14, %17 : vector<16x128xf32>
    %19 = math.exp %18 : vector<16x128xf32>
    %cst_12 = arith.constant dense<0.000000e+00> : vector<16xf32>
    %20 = vector.multi_reduction <add>, %19, %cst_12 [1] : vector<16x128xf32> to vector<16xf32>
    %21 = vector.shape_cast %20 : vector<16xf32> to vector<16x1xf32>
    %22 = tpu.reciprocal %21 {approx = true} : vector<16x1xf32> -> vector<16x1xf32>
    %23 = vector.broadcast %22 : vector<16x1xf32> to vector<16x128xf32>
    %24 = arith.mulf %19, %23 : vector<16x128xf32>
    %25 = arith.truncf %24 : vector<16x128xf32> to vector<16x128xbf16>
    %c0_13 = arith.constant 0 : index
    %c0_14 = arith.constant 0 : index
    %26 = vector.load %arg6[%c0_13, %c0_14] : memref<16x128xbf16, #tpu.memory_space<vmem>>, vector<16x128xbf16>
    tpu.vector_store %arg6[%c0_13, %c0_14], %25 {strides = array<i32>} : memref<16x128xbf16, #tpu.memory_space<vmem>>, vector<16x128xbf16>,
    return
  }
  func.func @transform_0(%arg0: i32) -> (i32, i32) {
    %c0_i32 = arith.constant 0 : i32
    %c0_i32_0 = arith.constant 0 : i32
    return %arg0, %c0_i32 : i32, i32
  }
  func.func @transform_1(%arg0: i32) -> (i32, i32) {
    %c0_i32 = arith.constant 0 : i32
    %c0_i32_0 = arith.constant 0 : i32
    %c0_i32_1 = arith.constant 0 : i32
    return %c0_i32, %c0_i32_0 : i32, i32
  }
  func.func @transform_2(%arg0: i32) -> (i32, i32) {
    %c0_i32 = arith.constant 0 : i32
    %c0_i32_0 = arith.constant 0 : i32
    %c0_i32_1 = arith.constant 0 : i32
    return %c0_i32, %c0_i32_0 : i32, i32
  }
  func.func @transform_3(%arg0: i32) -> (i32, i32) {
    %c0_i32 = arith.constant 0 : i32
    %c0_i32_0 = arith.constant 0 : i32
    %c0_i32_1 = arith.constant 0 : i32
    return %c0_i32, %c0_i32_0 : i32, i32
  }
  func.func @transform_4(%arg0: i32) -> (i32, i32) {
    %c0_i32 = arith.constant 0 : i32
    %c0_i32_0 = arith.constant 0 : i32
    %c0_i32_1 = arith.constant 0 : i32
    return %c0_i32, %c0_i32_0 : i32, i32
  }
  func.func @transform_5(%arg0: i32) -> (i32, i32) {
    %c0_i32 = arith.constant 0 : i32
    %c0_i32_0 = arith.constant 0 : i32
    return %arg0, %c0_i32 : i32, i32
  }
}

</mosaic_0001>

<llo_original>
// kernel: tpu_custom_call.1
$region0: #{tpu_custom_call.1}
  #allocation0 [shape = 'u32[]', space=smem, size = 0x4, offset = 0x4, fixed_abs, tag = 'smem constant byte address 0x4 - core index']
  #allocation1 [shape = 'u32[144,128]{1,0:T(1,128)}', space=vmem, size = 0x12000, scoped, tag = 'internal scratch']
  %s0 = inlined_call_operand.hbm [shape: f32[16,32], index: 0, kind: input, shape index: {}]
  %s1 = inlined_call_operand.hbm [shape: bf16[32,128], index: 1, kind: input, shape index: {}]
  %s2 = inlined_call_operand.vmem [shape: f32[1,128], index: 2, kind: input, shape index: {}]
  %s3 = inlined_call_operand.hbm [shape: bf16[128,128], index: 3, kind: input, shape index: {}]
  %s4 = inlined_call_operand.vmem [shape: f32[1,128], index: 4, kind: input, shape index: {}]
  %s5 = inlined_call_operand.hbm [shape: bf16[16,128], index: 5, kind: output, shape index: {}]
  %s6 = sld [smem:[#allocation0]]
  $region42: #{tpu_custom_call.1} parent=0
    _
  %s8 = ssub.s32 1, %s6
  %s9 = scalar_select 0, %s8, %s6
  $region1: #{tpu_custom_call.1} parent=0
    #allocation2 [shape = 'u8[8192]{0}', space=vmem, size = 0x2000, scoped, tag = 'input window, operand 0, single buffered']
    #allocation3 [shape = 's32[1]{0}', space=sflag, size = 0x4, scoped, tag = 'scoped memory for tpu_custom_call.1']
    #allocation4 [shape = 's32[1]{0}', space=sflag, size = 0x4, scoped, tag = 'scoped memory for tpu_custom_call.1']
    #allocation5 [shape = 'u8[8192]{0}', space=vmem, size = 0x2000, scoped, tag = 'input window, operand 1, single buffered']
    #allocation6 [shape = 's32[1]{0}', space=sflag, size = 0x4, scoped, tag = 'scoped memory for tpu_custom_call.1']
    #allocation7 [shape = 'u8[32768]{0}', space=vmem, size = 0x8000, scoped, tag = 'input window, operand 3, single buffered']
    #allocation8 [shape = 'u8[4096]{0}', space=vmem, size = 0x1000, scoped, tag = 'output window, operand 0, single buffered']
    %10 = vsyncpa [#allocation3], 0
    %11 = vsyncpa [#allocation6], 0
    %12 = vsyncpa [#allocation4], 0
    // Predicated region
    $region2: #{tpu_custom_call.1} parent=1 // pred_check
      _
    $region3: #{tpu_custom_call.1} parent=1 // pred_check_branch
      %14 = sbr.rel (0) target = $region5
    $region4: #{tpu_custom_call.1} parent=1 // pred_region
      %s16 = ssub.s32 256, 256
      %17 = vsyncadd [#allocation3], %s16
      %s18 = sshll.u32 [#allocation2], 4
      %s19 = int_to_ptr.vmem [resolvable:$true] %s18
      %24 = dma.hbm_to_vmem [thread:$0]  %s0, 256, %s19, [#allocation3], 128, 128, 8
    $region5: #{tpu_custom_call.1} parent=1 // pred_fallthru
      _
    // Predicated region
    $region6: #{tpu_custom_call.1} parent=1 // pred_check
      _
    $region7: #{tpu_custom_call.1} parent=1 // pred_check_branch
      %26 = sbr.rel (0) target = $region9
    $region8: #{tpu_custom_call.1} parent=1 // pred_region
      %s28 = ssub.s32 256, 256
      %29 = vsyncadd [#allocation6], %s28
      %s30 = sshll.u32 [#allocation5], 4
      %s31 = int_to_ptr.vmem [resolvable:$true] %s30
      %36 = dma.hbm_to_vmem [thread:$0]  %s1, 256, %s31, [#allocation6], 64, 64, 4
    $region9: #{tpu_custom_call.1} parent=1 // pred_fallthru
      _
    // Predicated region
    $region10: #{tpu_custom_call.1} parent=1 // pred_check
      _
    $region11: #{tpu_custom_call.1} parent=1 // pred_check_branch
      %38 = sbr.rel (0) target = $region13
    $region12: #{tpu_custom_call.1} parent=1 // pred_region
      _
    $region13: #{tpu_custom_call.1} parent=1 // pred_fallthru
      _
    // Predicated region
    $region14: #{tpu_custom_call.1} parent=1 // pred_check
      _
    $region15: #{tpu_custom_call.1} parent=1 // pred_check_branch
      %40 = sbr.rel (0) target = $region17
    $region16: #{tpu_custom_call.1} parent=1 // pred_region
      %s42 = ssub.s32 1024, 1024
      %43 = vsyncadd [#allocation6], %s42
      %s44 = sshll.u32 [#allocation7], 4
      %s45 = int_to_ptr.vmem [resolvable:$true] %s44
      %50 = dma.hbm_to_vmem [thread:$0]  %s3, 1024, %s45, [#allocation6], 64, 64, 4
    $region17: #{tpu_custom_call.1} parent=1 // pred_fallthru
      _
    // Predicated region
    $region18: #{tpu_custom_call.1} parent=1 // pred_check
      _
    $region19: #{tpu_custom_call.1} parent=1 // pred_check_branch
      %52 = sbr.rel (0) target = $region21
    $region20: #{tpu_custom_call.1} parent=1 // pred_region
      _
    $region21: #{tpu_custom_call.1} parent=1 // pred_fallthru
      _
    // Predicated region
    $region22: #{tpu_custom_call.1} parent=1 // pred_check
      _
    $region23: #{tpu_custom_call.1} parent=1 // pred_check_branch
      %54 = sbr.rel (0) target = $region25
    $region24: #{tpu_custom_call.1} parent=1 // pred_region
      %55 = dma.done [#allocation3], 256
    $region25: #{tpu_custom_call.1} parent=1 // pred_fallthru
      _
    // Predicated region
    $region26: #{tpu_custom_call.1} parent=1 // pred_check
      _
    $region27: #{tpu_custom_call.1} parent=1 // pred_check_branch
      %57 = sbr.rel (0) target = $region29
    $region28: #{tpu_custom_call.1} parent=1 // pred_region
      %58 = dma.done [#allocation6], 256
    $region29: #{tpu_custom_call.1} parent=1 // pred_fallthru
      _
    // Predicated region
    $region30: #{tpu_custom_call.1} parent=1 // pred_check
      _
    $region31: #{tpu_custom_call.1} parent=1 // pred_check_branch
      %60 = sbr.rel (0) target = $region33
    $region32: #{tpu_custom_call.1} parent=1 // pred_region
      %61 = dma.done [#allocation6], 1024
    $region33: #{tpu_custom_call.1} parent=1 // pred_fallthru
      _
    %v63 = vld [vmem:[#allocation2] sm:$0xff]
    %v64 = vld [vmem:[#allocation2 + $0x8] sm:$0xff]
    %v65 = vpack.c.bf16 %v64, %v63
    %v66 = vld [vmem:[#allocation5] sm:$0xf]
    %v67 = vld [vmem:[#allocation5 + $0x4] sm:$0xf]
    %v68 = vld [vmem:[#allocation5 + $0x8] sm:$0xf]
    %v69 = vld [vmem:[#allocation5 + $0xc] sm:$0xf]
    %v70 = vld [vmem:[%s2] sm:$0x1]
    %v72 = vlaneseq
    %v73 = vshrl.u32 %v72, 7
    %v74 = vsub.s32 0, %v73
    %v75 = vrot.slane %v70, %v74
    %v81 = vunpack.c.l.b16 %v66
    %v82 = vunpack.c.l.b16 %v67
    %v83 = vunpack.c.l.b16 %v68
    %v84 = vunpack.c.l.b16 %v69
    %v85 = vpack.c.b16 %v82, %v81
    %v86 = vpack.c.b16 %v84, %v83
    %vm89 = vcmask 261120
    %v91 = vsel %vm89, %v65, 0
    %93 = vmatprep.subr.bf16.mxu0 0
    %94 = vmatpush1.bf16.msra.mxu0 %v85
    %95 = vmatprep.subr.bf16.mxu0 0
    %96 = vmatpush1.bf16.msra.mxu0 %v86
    %97 = vmatprep.subr.bf16.mxu0 0
    %98 = vmatpush1.bf16.msra.mxu0 0
    %99 = vmatprep.subr.bf16.mxu0 0
    %100 = vmatpush1.bf16.msra.mxu0 0
    %101 = vmatprep.subr.bf16.mxu0 0
    %102 = vmatpush1.bf16.msra.mxu0 0
    %103 = vmatprep.subr.bf16.mxu0 0
    %104 = vmatpush1.bf16.msra.mxu0 0
    %105 = vmatprep.subr.bf16.mxu0 0
    %106 = vmatpush1.bf16.msra.mxu0 0
    %107 = vmatprep.subr.bf16.mxu0 0
    %108 = vmatpush1.bf16.msra.mxu0 0
    %109 = vmatprep.subr.bf16.mxu0 0
    %110 = vmatpush1.bf16.msra.mxu0 0
    %111 = vmatprep.subr.bf16.mxu0 0
    %112 = vmatpush1.bf16.msra.mxu0 0
    %113 = vmatprep.subr.bf16.mxu0 0
    %114 = vmatpush1.bf16.msra.mxu0 0
    %115 = vmatprep.subr.bf16.mxu0 0
    %116 = vmatpush1.bf16.msra.mxu0 0
    %117 = vmatprep.subr.bf16.mxu0 0
    %118 = vmatpush1.bf16.msra.mxu0 0
    %119 = vmatprep.subr.bf16.mxu0 0
    %120 = vmatpush1.bf16.msra.mxu0 0
    %121 = vmatprep.subr.bf16.mxu0 0
    %122 = vmatpush1.bf16.msra.mxu0 0
    %123 = vmatprep.subr.bf16.mxu0 0
    %124 = vmatpush1.bf16.msra.mxu0 0
    %125 = vmatprep.mubr.bf16.mxu0 0
    %126 = vmatmul.mubr.bf16.gmra.mrb[0].mxu0 %v91
    %v127 = vpop.f32.mrb[0].mxu0
    %v128 = vadd.f32 %v75, %v127
    %v129 = vpop.f32.mrb[0].mxu0
    %v130 = vpop.f32.mrb[0].mxu0
    %v131 = vadd.f32 %v75, %v130
    %v132 = vpop.f32.mrb[0].mxu0
    %133 = vdwg.mxu0
    %v134 = vmax.f32 %v128, 0.0
    %v135 = vmax.f32 %v131, 0.0
    %v136 = vpack.c.bf16 %v135, %v134
    %v137 = vld [vmem:[#allocation7] sm:$0xf]
    %v138 = vld [vmem:[#allocation7 + $0x4] sm:$0xf]
    %v139 = vld [vmem:[#allocation7 + $0x8] sm:$0xf]
    %v140 = vld [vmem:[#allocation7 + $0xc] sm:$0xf]
    %v141 = vld [vmem:[#allocation7 + $0x10] sm:$0xf]
    %v142 = vld [vmem:[#allocation7 + $0x14] sm:$0xf]
    %v143 = vld [vmem:[#allocation7 + $0x18] sm:$0xf]
    %v144 = vld [vmem:[#allocation7 + $0x1c] sm:$0xf]
    %v145 = vld [vmem:[#allocation7 + $0x20] sm:$0xf]
    %v146 = vld [vmem:[#allocation7 + $0x24] sm:$0xf]
    %v147 = vld [vmem:[#allocation7 + $0x28] sm:$0xf]
    %v148 = vld [vmem:[#allocation7 + $0x2c] sm:$0xf]
    %v149 = vld [vmem:[#allocation7 + $0x30] sm:$0xf]
    %v150 = vld [vmem:[#allocation7 + $0x34] sm:$0xf]
    %v151 = vld [vmem:[#allocation7 + $0x38] sm:$0xf]
    %v152 = vld [vmem:[#allocation7 + $0x3c] sm:$0xf]
    %v153 = vld [vmem:[%s4] sm:$0x1]
    %v155 = vlaneseq
    %v156 = vshrl.u32 %v155, 7
    %v157 = vsub.s32 0, %v156
    %v158 = vrot.slane %v153, %v157
    %v176 = vunpack.c.l.b16 %v137
    %v177 = vunpack.c.l.b16 %v138
    %v178 = vunpack.c.l.b16 %v139
    %v179 = vunpack.c.l.b16 %v140
    %v180 = vunpack.c.l.b16 %v141
    %v181 = vunpack.c.l.b16 %v142
    %v182 = vunpack.c.l.b16 %v143
    %v183 = vunpack.c.l.b16 %v144
    %v184 = vunpack.c.l.b16 %v145
    %v185 = vunpack.c.l.b16 %v146
    %v186 = vunpack.c.l.b16 %v147
    %v187 = vunpack.c.l.b16 %v148
    %v188 = vunpack.c.l.b16 %v149
    %v189 = vunpack.c.l.b16 %v150
    %v190 = vunpack.c.l.b16 %v151
    %v191 = vunpack.c.l.b16 %v152
    %v192 = vpack.c.b16 %v177, %v176
    %v193 = vpack.c.b16 %v179, %v178
    %v194 = vpack.c.b16 %v181, %v180
    %v195 = vpack.c.b16 %v183, %v182
    %v196 = vpack.c.b16 %v185, %v184
    %v197 = vpack.c.b16 %v187, %v186
    %v198 = vpack.c.b16 %v189, %v188
    %v199 = vpack.c.b16 %v191, %v190
    %208 = vmatprep.subr.bf16.mxu0 0
    %209 = vmatpush1.bf16.msra.mxu0 %v192
    %210 = vmatprep.subr.bf16.mxu0 0
    %211 = vmatpush1.bf16.msra.mxu0 %v193
    %212 = vmatprep.subr.bf16.mxu0 0
    %213 = vmatpush1.bf16.msra.mxu0 %v194
    %214 = vmatprep.subr.bf16.mxu0 0
    %215 = vmatpush1.bf16.msra.mxu0 %v195
    %216 = vmatprep.subr.bf16.mxu0 0
    %217 = vmatpush1.bf16.msra.mxu0 %v196
    %218 = vmatprep.subr.bf16.mxu0 0
    %219 = vmatpush1.bf16.msra.mxu0 %v197
    %220 = vmatprep.subr.bf16.mxu0 0
    %221 = vmatpush1.bf16.msra.mxu0 %v198
    %222 = vmatprep.subr.bf16.mxu0 0
    %223 = vmatpush1.bf16.msra.mxu0 %v199
    %224 = vmatprep.subr.bf16.mxu0 0
    %225 = vmatpush1.bf16.msra.mxu0 0
    %226 = vmatprep.subr.bf16.mxu0 0
    %227 = vmatpush1.bf16.msra.mxu0 0
    %228 = vmatprep.subr.bf16.mxu0 0
    %229 = vmatpush1.bf16.msra.mxu0 0
    %230 = vmatprep.subr.bf16.mxu0 0
    %231 = vmatpush1.bf16.msra.mxu0 0
    %232 = vmatprep.subr.bf16.mxu0 0
    %233 = vmatpush1.bf16.msra.mxu0 0
    %234 = vmatprep.subr.bf16.mxu0 0
    %235 = vmatpush1.bf16.msra.mxu0 0
    %236 = vmatprep.subr.bf16.mxu0 0
    %237 = vmatpush1.bf16.msra.mxu0 0
    %238 = vmatprep.subr.bf16.mxu0 0
    %239 = vmatpush1.bf16.msra.mxu0 0
    %240 = vmatprep.mubr.bf16.mxu0 0
    %241 = vmatmul.mubr.bf16.gmra.mrb[0].mxu0 %v136
    %v242 = vpop.f32.mrb[0].mxu0
    %v243 = vadd.f32 %v158, %v242
    %v244 = vpop.f32.mrb[0].mxu0
    %v245 = vpop.f32.mrb[0].mxu0
    %v246 = vadd.f32 %v158, %v245
    %v247 = vpop.f32.mrb[0].mxu0
    %248 = vdwg.mxu0
    %249 = vmax.xlane.f32.xlu0 %v243
    %v250 = vpop.xlane.xlu0 %249
    %251 = vmax.xlane.f32.xlu0 %v246
    %v252 = vpop.xlane.xlu0 %251
    %v253 = vsub.f32 %v243, %v250
    %v254 = vsub.f32 %v246, %v252
    %v255 = vmul.f32 %v253, 1.442695
    %v256 = vpow.pop %v255
    %v257 = vmul.f32 %v254, 1.442695
    %v258 = vpow.pop %v257
    %259 = vadd.xlane.f32.xlu0 %v256
    %v260 = vpop.xlane.xlu0 %259
    %261 = vadd.xlane.f32.xlu0 %v258
    %v262 = vpop.xlane.xlu0 %261
    %v263 = vrcp.pop %v260
    %v264 = vrcp.pop %v262
    %v265 = vmul.f32 %v256, %v263
    %v266 = vmul.f32 %v258, %v264
    %v267 = vpack.c.bf16 %v266, %v265
    %v269 = vunpack.c.l.b16 %v267
    %v270 = vunpack.c.h.b16 %v267
    %v271 = vpack.c.b16 %v269, %v269
    %v272 = vpack.c.b16 %v270, %v270
    %275 = vst [vmem:[#allocation8] sm:$0xf] %v271
    %276 = vst [vmem:[#allocation8 + $0x4] sm:$0xf] %v272
    // Predicated region
    $region34: #{tpu_custom_call.1} parent=1 // pred_check
      _
    $region35: #{tpu_custom_call.1} parent=1 // pred_check_branch
      %278 = sbr.rel (0) target = $region37
    $region36: #{tpu_custom_call.1} parent=1 // pred_region
      %s280 = ssub.s32 128, 128
      %281 = vsyncadd [#allocation4], %s280
      %s282 = sshll.u32 [#allocation8], 4
      %s283 = int_to_ptr.vmem [resolvable:$true] %s282
      %288 = dma.vmem_to_hbm [thread:$0]  %s283, 128, %s5, [#allocation4], 64, 64, 4
    $region37: #{tpu_custom_call.1} parent=1 // pred_fallthru
      _
    // Predicated region
    $region38: #{tpu_custom_call.1} parent=1 // pred_check
      _
    $region39: #{tpu_custom_call.1} parent=1 // pred_check_branch
      %290 = sbr.rel (0) target = $region41
    $region40: #{tpu_custom_call.1} parent=1 // pred_region
      %291 = dma.done [#allocation4], 128
    $region41: #{tpu_custom_call.1} parent=1 // pred_fallthru
      _
    %292 = vsyncpa [#allocation3], 1
    %293 = vsyncpa [#allocation6], 1
    %294 = vsyncpa [#allocation4], 1

</llo_original>
